<compile_context>
chip_gen: v7x
topology: tpu7x:2x2x1
jax: 0.10.0
libtpu: 0.0.40
codegen_flags: <defaults>
</compile_context>

<pallas_src>
import functools

import jax
import jax.numpy as jnp
from jax import lax
from jax.experimental import pallas as pl
from jax.experimental.pallas import tpu as pltpu


def _fused_lstm_kernel(x2d_ref, wih_ref, wblk_ref, b_ref, out_ref,
                       *, T, B, H, n_dir):
    """Single-invocation fused (bi-)LSTM recurrence.

    x2d_ref  : (T*B, D)            bf16  flattened input sequence
    wih_ref  : (D, n_dir*4H)       bf16  [W_ih_f^T | W_ih_b^T], gate order i,f,o,g
    wblk_ref : (n_dir*H, 4H)       bf16  [W_hh_f^T ; W_hh_b^T] (block-diag RHS)
    b_ref    : (1, n_dir*4H)       f32   combined biases (b_ih + b_hh) per dir
    out_ref  : (T, B, n_dir*H)     f32   hidden states (fwd | bwd concatenated)
    """
    four_h = 4 * H

    # Bulk input-side matmul for every timestep and every direction at once;
    # bias folded in.  Kept as a traced value (fits in the vreg file at these
    # shapes) and sliced with static indices below — no VMEM scratch traffic.
    gx = (
        jnp.dot(x2d_ref[...], wih_ref[...], preferred_element_type=jnp.float32)
        + b_ref[...]
    )  # (T*B, n_dir*4H)

    w_blk = wblk_ref[...]  # (n_dir*H, 4H) bf16, loaded once

    if n_dir == 2:
        # Block-diagonal mask to pack [h_f | 0 ; 0 | h_b] for the single fused
        # recurrent matmul (hoisted out of the loop).
        row = lax.broadcasted_iota(jnp.int32, (2 * B, 2 * H), 0)
        col = lax.broadcasted_iota(jnp.int32, (2 * B, 2 * H), 1)
        diag_mask = (((row < B) & (col < H)) | ((row >= B) & (col >= H))
                     ).astype(jnp.bfloat16)

    # State: rows [0, B) = forward chain, rows [B, 2B) = backward chain.
    s_blk = jnp.zeros((n_dir * B, n_dir * H), jnp.bfloat16)  # block-diag h
    c = jnp.zeros((n_dir * B, H), jnp.float32)

    outs_f = []
    outs_b = []
    for s in range(T):  # static, fully unrolled (T is small)
        # One MXU issue covers BOTH directions' recurrent contributions.
        rec = jnp.dot(s_blk, w_blk, preferred_element_type=jnp.float32)  # (n_dir*B, 4H)

        if n_dir == 2:
            # fwd consumes timestep s, bwd consumes timestep T-1-s.
            gx_step = jnp.concatenate(
                [gx[s * B:(s + 1) * B, :four_h],
                 gx[(T - 1 - s) * B:(T - s) * B, four_h:]],
                axis=0,
            )
        else:
            gx_step = gx[s * B:(s + 1) * B, :]

        gates = rec + gx_step  # (n_dir*B, 4H), f32

        # Gate order [i, f, o, g]: one wide sigmoid, one wide tanh.
        sig = jax.nn.sigmoid(gates[:, :3 * H])
        i_g = sig[:, 0 * H:1 * H]
        f_g = sig[:, 1 * H:2 * H]
        o_g = sig[:, 2 * H:3 * H]
        g_g = jnp.tanh(gates[:, 3 * H:])

        c = f_g * c + i_g * g_g
        h = o_g * jnp.tanh(c)          # (n_dir*B, H) f32
        h_bf = h.astype(jnp.bfloat16)

        if n_dir == 2:
            s_blk = jnp.concatenate([h_bf, h_bf], axis=1) * diag_mask
            outs_f.append(h[:B])
            outs_b.append(h[B:])
        else:
            s_blk = h_bf
            outs_f.append(h)

    # Assemble the whole output in registers and do ONE bulk store.
    if n_dir == 2:
        rows = [jnp.concatenate([outs_f[t], outs_b[T - 1 - t]], axis=1)
                for t in range(T)]
    else:
        rows = outs_f
    out_ref[...] = jnp.stack(rows, axis=0).astype(out_ref.dtype)


def rnn_forward(x, params, bi_dir=True):
    """Equivalent of RNN.forward in 'batch' mode with cell_type='lstm'.

    x      : (T, B, input_dim)
    params : {"f": cell_params, "b": cell_params}; each cell has PyTorch
             LSTMCell layout w_ih (4H, D), w_hh (4H, H), b_ih/b_hh (4H,)
             with gate row order [i, f, g, o].
    returns (T, B, out_dim) where out_dim = 2H if bi_dir else H.
    """
    T, B, D = x.shape
    dirs = ["f", "b"] if bi_dir else ["f"]
    n_dir = len(dirs)
    H = params["f"]["w_hh"].shape[1]
    four_h = 4 * H

    def reorder_rows(w):  # gate rows [i, f, g, o] -> [i, f, o, g]
        return jnp.concatenate([w[:2 * H], w[3 * H:], w[2 * H:3 * H]], axis=0)

    # [W_ih_f^T | W_ih_b^T] : (D, n_dir*4H), bf16
    wih_cat = jnp.concatenate(
        [reorder_rows(jnp.asarray(params[k]["w_ih"], jnp.float32)).T for k in dirs],
        axis=1,
    ).astype(jnp.bfloat16)
    # [W_hh_f^T ; W_hh_b^T] : (n_dir*H, 4H), bf16 (block-diagonal RHS)
    w_blk = jnp.concatenate(
        [reorder_rows(jnp.asarray(params[k]["w_hh"], jnp.float32)).T for k in dirs],
        axis=0,
    ).astype(jnp.bfloat16)
    # combined biases : (1, n_dir*4H), f32
    bias_cat = jnp.concatenate(
        [reorder_rows(jnp.asarray(params[k]["b_ih"], jnp.float32)
                      + jnp.asarray(params[k]["b_hh"], jnp.float32)) for k in dirs],
        axis=0,
    ).reshape(1, n_dir * four_h)

    x2d = x.reshape(T * B, D).astype(jnp.bfloat16)

    kernel = functools.partial(_fused_lstm_kernel, T=T, B=B, H=H, n_dir=n_dir)

    out = pl.pallas_call(
        kernel,
        out_shape=jax.ShapeDtypeStruct((T, B, n_dir * H), jnp.float32),
        in_specs=[
            pl.BlockSpec(memory_space=pltpu.MemorySpace.VMEM),  # x2d
            pl.BlockSpec(memory_space=pltpu.MemorySpace.VMEM),  # wih_cat
            pl.BlockSpec(memory_space=pltpu.MemorySpace.VMEM),  # w_blk
            pl.BlockSpec(memory_space=pltpu.MemorySpace.VMEM),  # bias_cat
        ],
        out_specs=pl.BlockSpec(memory_space=pltpu.MemorySpace.VMEM),
    )(x2d, wih_cat, w_blk, bias_cat)

    return out


# ---------------- pure-JAX reference (for correctness check) ----------------
def _lstm_ref_dir(x, w_ih, w_hh, b_ih, b_hh):
    T, B, D = x.shape
    H = w_ih.shape[0] // 4

    def step(carry, x_t):
        h, c = carry
        gates = x_t @ w_ih.T + b_ih + h @ w_hh.T + b_hh
        i = jax.nn.sigmoid(gates[:, 0 * H:1 * H])
        f = jax.nn.sigmoid(gates[:, 1 * H:2 * H])
        g = jnp.tanh(gates[:, 2 * H:3 * H])
        o = jax.nn.sigmoid(gates[:, 3 * H:4 * H])
        c = f * c + i * g
        h = o * jnp.tanh(c)
        return (h, c), h

    init = (jnp.zeros((B, H), jnp.float32), jnp.zeros((B, H), jnp.float32))
    _, hs = jax.lax.scan(step, init, x)
    return hs


def rnn_ref(x, params, bi_dir=True):
    out_f = _lstm_ref_dir(x, params["f"]["w_ih"], params["f"]["w_hh"],
                          params["f"]["b_ih"], params["f"]["b_hh"])
    if not bi_dir:
        return out_f
    out_b = _lstm_ref_dir(x[::-1], params["b"]["w_ih"], params["b"]["w_hh"],
                          params["b"]["b_ih"], params["b"]["b_hh"])[::-1]
    return jnp.concatenate((out_f, out_b), axis=2)


def init_lstm_cell_params(key, input_dim, hidden_dim):
    """Deterministic init mimicking nn.LSTMCell's uniform(-1/sqrt(H), 1/sqrt(H))."""
    k = 1.0 / jnp.sqrt(jnp.asarray(hidden_dim, jnp.float32))
    k1, k2, k3, k4 = jax.random.split(key, 4)
    return {
        "w_ih": jax.random.uniform(k1, (4 * hidden_dim, input_dim), jnp.float32, -k, k),
        "w_hh": jax.random.uniform(k2, (4 * hidden_dim, hidden_dim), jnp.float32, -k, k),
        "b_ih": jax.random.uniform(k3, (4 * hidden_dim,), jnp.float32, -k, k),
        "b_hh": jax.random.uniform(k4, (4 * hidden_dim,), jnp.float32, -k, k),
    }


if __name__ == "__main__":
    # RNN(input_dim=16, out_dim=64, cell_type='lstm', bi_dir=True) -> hidden_dim=32
    T, B, INPUT_DIM, OUT_DIM = 8, 8, 16, 64
    HIDDEN_DIM = OUT_DIM // 2  # bi-directional

    root = jax.random.PRNGKey(0)
    kx, kf, kb = jax.random.split(root, 3)

    x = jax.random.normal(kx, (T, B, INPUT_DIM), jnp.float32)
    params = {
        "f": init_lstm_cell_params(kf, INPUT_DIM, HIDDEN_DIM),
        "b": init_lstm_cell_params(kb, INPUT_DIM, HIDDEN_DIM),
    }

    # bi-directional (primary configuration)
    out = jax.block_until_ready(rnn_forward(x, params, bi_dir=True))
    ref = jax.block_until_ready(rnn_ref(x, params, bi_dir=True))
    assert out.shape == (T, B, OUT_DIM), out.shape
    max_err = float(jnp.max(jnp.abs(out - ref)))
    # Tolerance is loosened vs the pure-f32 reference because the MXU inputs
    # (x, W_ih, W_hh, h) are bf16; state/gate math is still f32.
    assert jnp.allclose(out, ref, atol=2e-2, rtol=2e-2), max_err

    # uni-directional path (same kernel, n_dir=1)
    out1 = jax.block_until_ready(rnn_forward(x, params, bi_dir=False))
    ref1 = jax.block_until_ready(rnn_ref(x, params, bi_dir=False))
    assert out1.shape == (T, B, HIDDEN_DIM), out1.shape
    max_err1 = float(jnp.max(jnp.abs(out1 - ref1)))
    assert jnp.allclose(out1, ref1, atol=2e-2, rtol=2e-2), max_err1

    print("KERNEL_OK")
</pallas_src>

<mosaic_0001>
module attributes {stable_mosaic.version = 11 : i64} {
  func.func @_fused_lstm_kernel(%arg0: memref<64x16xbf16, #tpu.memory_space<vmem>>, %arg1: memref<16x256xbf16, #tpu.memory_space<vmem>>, %arg2: memref<64x128xbf16, #tpu.memory_space<vmem>>, %arg3: memref<1x256xf32, #tpu.memory_space<vmem>>, %arg4: memref<8x8x64xf32, #tpu.memory_space<vmem>>) attributes {dimension_semantics = [], scalar_prefetch = 0 : i64, scratch_operands = 0 : i64, tpu.core_type = #tpu.core_type<tc>} {
    %c0 = arith.constant 0 : index
    %c0_0 = arith.constant 0 : index
    %0 = vector.load %arg0[%c0, %c0_0] : memref<64x16xbf16, #tpu.memory_space<vmem>>, vector<64x16xbf16>
    %c0_1 = arith.constant 0 : index
    %c0_2 = arith.constant 0 : index
    %1 = vector.load %arg1[%c0_1, %c0_2] : memref<16x256xbf16, #tpu.memory_space<vmem>>, vector<16x256xbf16>
    %cst = arith.constant dense<0.000000e+00> : vector<64x256xf32>
    %2 = tpu.matmul %0, %1, %cst {dimension_numbers = #tpu.dot_dimension_numbers<[1], [0], [0], [1], [0, 0, 1, 1], [], []>} : vector<64x16xbf16>, vector<16x256xbf16>, vector<64x256xf32> -> vector<64x256xf32>
    %c0_3 = arith.constant 0 : index
    %c0_4 = arith.constant 0 : index
    %3 = vector.load %arg3[%c0_3, %c0_4] : memref<1x256xf32, #tpu.memory_space<vmem>>, vector<1x256xf32>
    %4 = vector.broadcast %3 : vector<1x256xf32> to vector<64x256xf32>
    %5 = arith.addf %2, %4 : vector<64x256xf32>
    %c0_5 = arith.constant 0 : index
    %c0_6 = arith.constant 0 : index
    %6 = vector.load %arg2[%c0_5, %c0_6] : memref<64x128xbf16, #tpu.memory_space<vmem>>, vector<64x128xbf16>
    %7 = tpu.iota {dimensions = array<i32: 0>} : vector<16x64xi32>
    %8 = tpu.iota {dimensions = array<i32: 1>} : vector<16x64xi32>
    %c8_i32 = arith.constant 8 : i32
    %9 = vector.broadcast %c8_i32 : i32 to vector<16x64xi32>
    %10 = arith.cmpi slt, %7, %9 : vector<16x64xi32>
    %c32_i32 = arith.constant 32 : i32
    %11 = vector.broadcast %c32_i32 : i32 to vector<16x64xi32>
    %12 = arith.cmpi slt, %8, %11 : vector<16x64xi32>
    %13 = arith.andi %10, %12 : vector<16x64xi1>
    %c8_i32_7 = arith.constant 8 : i32
    %14 = vector.broadcast %c8_i32_7 : i32 to vector<16x64xi32>
    %15 = arith.cmpi sge, %7, %14 : vector<16x64xi32>
    %c32_i32_8 = arith.constant 32 : i32
    %16 = vector.broadcast %c32_i32_8 : i32 to vector<16x64xi32>
    %17 = arith.cmpi sge, %8, %16 : vector<16x64xi32>
    %18 = arith.andi %15, %17 : vector<16x64xi1>
    %19 = arith.ori %13, %18 : vector<16x64xi1>
    %20 = arith.extui %19 : vector<16x64xi1> to vector<16x64xi32>
    %21 = arith.sitofp %20 : vector<16x64xi32> to vector<16x64xf32>
    %22 = arith.truncf %21 : vector<16x64xf32> to vector<16x64xbf16>
    %cst_9 = arith.constant 0.000000e+00 : bf16
    %23 = vector.broadcast %cst_9 : bf16 to vector<16x64xbf16>
    %cst_10 = arith.constant 0.000000e+00 : f32
    %24 = vector.broadcast %cst_10 : f32 to vector<16x32xf32>
    %cst_11 = arith.constant dense<0.000000e+00> : vector<16x128xf32>
    %25 = tpu.matmul %23, %6, %cst_11 {dimension_numbers = #tpu.dot_dimension_numbers<[1], [0], [0], [1], [0, 0, 1, 1], [], []>} : vector<16x64xbf16>, vector<64x128xbf16>, vector<16x128xf32> -> vector<16x128xf32>
    %26 = vector.extract_strided_slice %5 {offsets = [0, 0], sizes = [8, 128], strides = [1, 1]} : vector<64x256xf32> to vector<8x128xf32>
    %27 = vector.extract_strided_slice %5 {offsets = [56, 128], sizes = [8, 128], strides = [1, 1]} : vector<64x256xf32> to vector<8x128xf32>
    %28 = tpu.concatenate %26, %27 in 0 : vector<8x128xf32>, vector<8x128xf32> -> vector<16x128xf32>
    %29 = arith.addf %25, %28 : vector<16x128xf32>
    %30 = vector.extract_strided_slice %29 {offsets = [0, 0], sizes = [16, 96], strides = [1, 1]} : vector<16x128xf32> to vector<16x96xf32>
    %31 = arith.negf %30 : vector<16x96xf32>
    %32 = math.exp %31 : vector<16x96xf32>
    %cst_12 = arith.constant 1.000000e+00 : f32
    %33 = vector.broadcast %cst_12 : f32 to vector<16x96xf32>
    %34 = arith.addf %33, %32 : vector<16x96xf32>
    %35 = arith.divf %33, %34 : vector<16x96xf32>
    %36 = vector.extract_strided_slice %35 {offsets = [0, 0], sizes = [16, 32], strides = [1, 1]} : vector<16x96xf32> to vector<16x32xf32>
    %37 = vector.extract_strided_slice %35 {offsets = [0, 32], sizes = [16, 32], strides = [1, 1]} : vector<16x96xf32> to vector<16x32xf32>
    %38 = vector.extract_strided_slice %35 {offsets = [0, 64], sizes = [16, 32], strides = [1, 1]} : vector<16x96xf32> to vector<16x32xf32>
    %39 = vector.extract_strided_slice %29 {offsets = [0, 96], sizes = [16, 32], strides = [1, 1]} : vector<16x128xf32> to vector<16x32xf32>
    %40 = math.tanh %39 : vector<16x32xf32>
    %41 = arith.mulf %37, %24 : vector<16x32xf32>
    %42 = arith.mulf %36, %40 : vector<16x32xf32>
    %43 = arith.addf %41, %42 : vector<16x32xf32>
    %44 = math.tanh %43 : vector<16x32xf32>
    %45 = arith.mulf %38, %44 : vector<16x32xf32>
    %46 = arith.truncf %45 : vector<16x32xf32> to vector<16x32xbf16>
    %47 = tpu.concatenate %46, %46 in 1 : vector<16x32xbf16>, vector<16x32xbf16> -> vector<16x64xbf16>
    %48 = arith.mulf %47, %22 : vector<16x64xbf16>
    %49 = vector.extract_strided_slice %45 {offsets = [0, 0], sizes = [8, 32], strides = [1, 1]} : vector<16x32xf32> to vector<8x32xf32>
    %50 = vector.extract_strided_slice %45 {offsets = [8, 0], sizes = [8, 32], strides = [1, 1]} : vector<16x32xf32> to vector<8x32xf32>
    %cst_13 = arith.constant dense<0.000000e+00> : vector<16x128xf32>
    %51 = tpu.matmul %48, %6, %cst_13 {dimension_numbers = #tpu.dot_dimension_numbers<[1], [0], [0], [1], [0, 0, 1, 1], [], []>} : vector<16x64xbf16>, vector<64x128xbf16>, vector<16x128xf32> -> vector<16x128xf32>
    %52 = vector.extract_strided_slice %5 {offsets = [8, 0], sizes = [8, 128], strides = [1, 1]} : vector<64x256xf32> to vector<8x128xf32>
    %53 = vector.extract_strided_slice %5 {offsets = [48, 128], sizes = [8, 128], strides = [1, 1]} : vector<64x256xf32> to vector<8x128xf32>
    %54 = tpu.concatenate %52, %53 in 0 : vector<8x128xf32>, vector<8x128xf32> -> vector<16x128xf32>
    %55 = arith.addf %51, %54 : vector<16x128xf32>
    %56 = vector.extract_strided_slice %55 {offsets = [0, 0], sizes = [16, 96], strides = [1, 1]} : vector<16x128xf32> to vector<16x96xf32>
    %57 = arith.negf %56 : vector<16x96xf32>
    %58 = math.exp %57 : vector<16x96xf32>
    %cst_14 = arith.constant 1.000000e+00 : f32
    %59 = vector.broadcast %cst_14 : f32 to vector<16x96xf32>
    %60 = arith.addf %59, %58 : vector<16x96xf32>
    %61 = arith.divf %59, %60 : vector<16x96xf32>
    %62 = vector.extract_strided_slice %61 {offsets = [0, 0], sizes = [16, 32], strides = [1, 1]} : vector<16x96xf32> to vector<16x32xf32>
    %63 = vector.extract_strided_slice %61 {offsets = [0, 32], sizes = [16, 32], strides = [1, 1]} : vector<16x96xf32> to vector<16x32xf32>
    %64 = vector.extract_strided_slice %61 {offsets = [0, 64], sizes = [16, 32], strides = [1, 1]} : vector<16x96xf32> to vector<16x32xf32>
    %65 = vector.extract_strided_slice %55 {offsets = [0, 96], sizes = [16, 32], strides = [1, 1]} : vector<16x128xf32> to vector<16x32xf32>
    %66 = math.tanh %65 : vector<16x32xf32>
    %67 = arith.mulf %63, %43 : vector<16x32xf32>
    %68 = arith.mulf %62, %66 : vector<16x32xf32>
    %69 = arith.addf %67, %68 : vector<16x32xf32>
    %70 = math.tanh %69 : vector<16x32xf32>
    %71 = arith.mulf %64, %70 : vector<16x32xf32>
    %72 = arith.truncf %71 : vector<16x32xf32> to vector<16x32xbf16>
    %73 = tpu.concatenate %72, %72 in 1 : vector<16x32xbf16>, vector<16x32xbf16> -> vector<16x64xbf16>
    %74 = arith.mulf %73, %22 : vector<16x64xbf16>
    %75 = vector.extract_strided_slice %71 {offsets = [0, 0], sizes = [8, 32], strides = [1, 1]} : vector<16x32xf32> to vector<8x32xf32>
    %76 = vector.extract_strided_slice %71 {offsets = [8, 0], sizes = [8, 32], strides = [1, 1]} : vector<16x32xf32> to vector<8x32xf32>
    %cst_15 = arith.constant dense<0.000000e+00> : vector<16x128xf32>
    %77 = tpu.matmul %74, %6, %cst_15 {dimension_numbers = #tpu.dot_dimension_numbers<[1], [0], [0], [1], [0, 0, 1, 1], [], []>} : vector<16x64xbf16>, vector<64x128xbf16>, vector<16x128xf32> -> vector<16x128xf32>
    %78 = vector.extract_strided_slice %5 {offsets = [16, 0], sizes = [8, 128], strides = [1, 1]} : vector<64x256xf32> to vector<8x128xf32>
    %79 = vector.extract_strided_slice %5 {offsets = [40, 128], sizes = [8, 128], strides = [1, 1]} : vector<64x256xf32> to vector<8x128xf32>
    %80 = tpu.concatenate %78, %79 in 0 : vector<8x128xf32>, vector<8x128xf32> -> vector<16x128xf32>
    %81 = arith.addf %77, %80 : vector<16x128xf32>
    %82 = vector.extract_strided_slice %81 {offsets = [0, 0], sizes = [16, 96], strides = [1, 1]} : vector<16x128xf32> to vector<16x96xf32>
    %83 = arith.negf %82 : vector<16x96xf32>
    %84 = math.exp %83 : vector<16x96xf32>
    %cst_16 = arith.constant 1.000000e+00 : f32
    %85 = vector.broadcast %cst_16 : f32 to vector<16x96xf32>
    %86 = arith.addf %85, %84 : vector<16x96xf32>
    %87 = arith.divf %85, %86 : vector<16x96xf32>
    %88 = vector.extract_strided_slice %87 {offsets = [0, 0], sizes = [16, 32], strides = [1, 1]} : vector<16x96xf32> to vector<16x32xf32>
    %89 = vector.extract_strided_slice %87 {offsets = [0, 32], sizes = [16, 32], strides = [1, 1]} : vector<16x96xf32> to vector<16x32xf32>
    %90 = vector.extract_strided_slice %87 {offsets = [0, 64], sizes = [16, 32], strides = [1, 1]} : vector<16x96xf32> to vector<16x32xf32>
    %91 = vector.extract_strided_slice %81 {offsets = [0, 96], sizes = [16, 32], strides = [1, 1]} : vector<16x128xf32> to vector<16x32xf32>
    %92 = math.tanh %91 : vector<16x32xf32>
    %93 = arith.mulf %89, %69 : vector<16x32xf32>
    %94 = arith.mulf %88, %92 : vector<16x32xf32>
    %95 = arith.addf %93, %94 : vector<16x32xf32>
    %96 = math.tanh %95 : vector<16x32xf32>
    %97 = arith.mulf %90, %96 : vector<16x32xf32>
    %98 = arith.truncf %97 : vector<16x32xf32> to vector<16x32xbf16>
    %99 = tpu.concatenate %98, %98 in 1 : vector<16x32xbf16>, vector<16x32xbf16> -> vector<16x64xbf16>
    %100 = arith.mulf %99, %22 : vector<16x64xbf16>
    %101 = vector.extract_strided_slice %97 {offsets = [0, 0], sizes = [8, 32], strides = [1, 1]} : vector<16x32xf32> to vector<8x32xf32>
    %102 = vector.extract_strided_slice %97 {offsets = [8, 0], sizes = [8, 32], strides = [1, 1]} : vector<16x32xf32> to vector<8x32xf32>
    %cst_17 = arith.constant dense<0.000000e+00> : vector<16x128xf32>
    %103 = tpu.matmul %100, %6, %cst_17 {dimension_numbers = #tpu.dot_dimension_numbers<[1], [0], [0], [1], [0, 0, 1, 1], [], []>} : vector<16x64xbf16>, vector<64x128xbf16>, vector<16x128xf32> -> vector<16x128xf32>
    %104 = vector.extract_strided_slice %5 {offsets = [24, 0], sizes = [8, 128], strides = [1, 1]} : vector<64x256xf32> to vector<8x128xf32>
    %105 = vector.extract_strided_slice %5 {offsets = [32, 128], sizes = [8, 128], strides = [1, 1]} : vector<64x256xf32> to vector<8x128xf32>
    %106 = tpu.concatenate %104, %105 in 0 : vector<8x128xf32>, vector<8x128xf32> -> vector<16x128xf32>
    %107 = arith.addf %103, %106 : vector<16x128xf32>
    %108 = vector.extract_strided_slice %107 {offsets = [0, 0], sizes = [16, 96], strides = [1, 1]} : vector<16x128xf32> to vector<16x96xf32>
    %109 = arith.negf %108 : vector<16x96xf32>
    %110 = math.exp %109 : vector<16x96xf32>
    %cst_18 = arith.constant 1.000000e+00 : f32
    %111 = vector.broadcast %cst_18 : f32 to vector<16x96xf32>
    %112 = arith.addf %111, %110 : vector<16x96xf32>
    %113 = arith.divf %111, %112 : vector<16x96xf32>
    %114 = vector.extract_strided_slice %113 {offsets = [0, 0], sizes = [16, 32], strides = [1, 1]} : vector<16x96xf32> to vector<16x32xf32>
    %115 = vector.extract_strided_slice %113 {offsets = [0, 32], sizes = [16, 32], strides = [1, 1]} : vector<16x96xf32> to vector<16x32xf32>
    %116 = vector.extract_strided_slice %113 {offsets = [0, 64], sizes = [16, 32], strides = [1, 1]} : vector<16x96xf32> to vector<16x32xf32>
    %117 = vector.extract_strided_slice %107 {offsets = [0, 96], sizes = [16, 32], strides = [1, 1]} : vector<16x128xf32> to vector<16x32xf32>
    %118 = math.tanh %117 : vector<16x32xf32>
    %119 = arith.mulf %115, %95 : vector<16x32xf32>
    %120 = arith.mulf %114, %118 : vector<16x32xf32>
    %121 = arith.addf %119, %120 : vector<16x32xf32>
    %122 = math.tanh %121 : vector<16x32xf32>
    %123 = arith.mulf %116, %122 : vector<16x32xf32>
    %124 = arith.truncf %123 : vector<16x32xf32> to vector<16x32xbf16>
    %125 = tpu.concatenate %124, %124 in 1 : vector<16x32xbf16>, vector<16x32xbf16> -> vector<16x64xbf16>
    %126 = arith.mulf %125, %22 : vector<16x64xbf16>
    %127 = vector.extract_strided_slice %123 {offsets = [0, 0], sizes = [8, 32], strides = [1, 1]} : vector<16x32xf32> to vector<8x32xf32>
    %128 = vector.extract_strided_slice %123 {offsets = [8, 0], sizes = [8, 32], strides = [1, 1]} : vector<16x32xf32> to vector<8x32xf32>
    %cst_19 = arith.constant dense<0.000000e+00> : vector<16x128xf32>
    %129 = tpu.matmul %126, %6, %cst_19 {dimension_numbers = #tpu.dot_dimension_numbers<[1], [0], [0], [1], [0, 0, 1, 1], [], []>} : vector<16x64xbf16>, vector<64x128xbf16>, vector<16x128xf32> -> vector<16x128xf32>
    %130 = vector.extract_strided_slice %5 {offsets = [32, 0], sizes = [8, 128], strides = [1, 1]} : vector<64x256xf32> to vector<8x128xf32>
    %131 = vector.extract_strided_slice %5 {offsets = [24, 128], sizes = [8, 128], strides = [1, 1]} : vector<64x256xf32> to vector<8x128xf32>
    %132 = tpu.concatenate %130, %131 in 0 : vector<8x128xf32>, vector<8x128xf32> -> vector<16x128xf32>
    %133 = arith.addf %129, %132 : vector<16x128xf32>
    %134 = vector.extract_strided_slice %133 {offsets = [0, 0], sizes = [16, 96], strides = [1, 1]} : vector<16x128xf32> to vector<16x96xf32>
    %135 = arith.negf %134 : vector<16x96xf32>
    %136 = math.exp %135 : vector<16x96xf32>
    %cst_20 = arith.constant 1.000000e+00 : f32
    %137 = vector.broadcast %cst_20 : f32 to vector<16x96xf32>
    %138 = arith.addf %137, %136 : vector<16x96xf32>
    %139 = arith.divf %137, %138 : vector<16x96xf32>
    %140 = vector.extract_strided_slice %139 {offsets = [0, 0], sizes = [16, 32], strides = [1, 1]} : vector<16x96xf32> to vector<16x32xf32>
    %141 = vector.extract_strided_slice %139 {offsets = [0, 32], sizes = [16, 32], strides = [1, 1]} : vector<16x96xf32> to vector<16x32xf32>
    %142 = vector.extract_strided_slice %139 {offsets = [0, 64], sizes = [16, 32], strides = [1, 1]} : vector<16x96xf32> to vector<16x32xf32>
    %143 = vector.extract_strided_slice %133 {offsets = [0, 96], sizes = [16, 32], strides = [1, 1]} : vector<16x128xf32> to vector<16x32xf32>
    %144 = math.tanh %143 : vector<16x32xf32>
    %145 = arith.mulf %141, %121 : vector<16x32xf32>
    %146 = arith.mulf %140, %144 : vector<16x32xf32>
    %147 = arith.addf %145, %146 : vector<16x32xf32>
    %148 = math.tanh %147 : vector<16x32xf32>
    %149 = arith.mulf %142, %148 : vector<16x32xf32>
    %150 = arith.truncf %149 : vector<16x32xf32> to vector<16x32xbf16>
    %151 = tpu.concatenate %150, %150 in 1 : vector<16x32xbf16>, vector<16x32xbf16> -> vector<16x64xbf16>
    %152 = arith.mulf %151, %22 : vector<16x64xbf16>
    %153 = vector.extract_strided_slice %149 {offsets = [0, 0], sizes = [8, 32], strides = [1, 1]} : vector<16x32xf32> to vector<8x32xf32>
    %154 = vector.extract_strided_slice %149 {offsets = [8, 0], sizes = [8, 32], strides = [1, 1]} : vector<16x32xf32> to vector<8x32xf32>
    %cst_21 = arith.constant dense<0.000000e+00> : vector<16x128xf32>
    %155 = tpu.matmul %152, %6, %cst_21 {dimension_numbers = #tpu.dot_dimension_numbers<[1], [0], [0], [1], [0, 0, 1, 1], [], []>} : vector<16x64xbf16>, vector<64x128xbf16>, vector<16x128xf32> -> vector<16x128xf32>
    %156 = vector.extract_strided_slice %5 {offsets = [40, 0], sizes = [8, 128], strides = [1, 1]} : vector<64x256xf32> to vector<8x128xf32>
    %157 = vector.extract_strided_slice %5 {offsets = [16, 128], sizes = [8, 128], strides = [1, 1]} : vector<64x256xf32> to vector<8x128xf32>
    %158 = tpu.concatenate %156, %157 in 0 : vector<8x128xf32>, vector<8x128xf32> -> vector<16x128xf32>
    %159 = arith.addf %155, %158 : vector<16x128xf32>
    %160 = vector.extract_strided_slice %159 {offsets = [0, 0], sizes = [16, 96], strides = [1, 1]} : vector<16x128xf32> to vector<16x96xf32>
    %161 = arith.negf %160 : vector<16x96xf32>
    %162 = math.exp %161 : vector<16x96xf32>
    %cst_22 = arith.constant 1.000000e+00 : f32
    %163 = vector.broadcast %cst_22 : f32 to vector<16x96xf32>
    %164 = arith.addf %163, %162 : vector<16x96xf32>
    %165 = arith.divf %163, %164 : vector<16x96xf32>
    %166 = vector.extract_strided_slice %165 {offsets = [0, 0], sizes = [16, 32], strides = [1, 1]} : vector<16x96xf32> to vector<16x32xf32>
    %167 = vector.extract_strided_slice %165 {offsets = [0, 32], sizes = [16, 32], strides = [1, 1]} : vector<16x96xf32> to vector<16x32xf32>
    %168 = vector.extract_strided_slice %165 {offsets = [0, 64], sizes = [16, 32], strides = [1, 1]} : vector<16x96xf32> to vector<16x32xf32>
    %169 = vector.extract_strided_slice %159 {offsets = [0, 96], sizes = [16, 32], strides = [1, 1]} : vector<16x128xf32> to vector<16x32xf32>
    %170 = math.tanh %169 : vector<16x32xf32>
    %171 = arith.mulf %167, %147 : vector<16x32xf32>
    %172 = arith.mulf %166, %170 : vector<16x32xf32>
    %173 = arith.addf %171, %172 : vector<16x32xf32>
    %174 = math.tanh %173 : vector<16x32xf32>
    %175 = arith.mulf %168, %174 : vector<16x32xf32>
    %176 = arith.truncf %175 : vector<16x32xf32> to vector<16x32xbf16>
    %177 = tpu.concatenate %176, %176 in 1 : vector<16x32xbf16>, vector<16x32xbf16> -> vector<16x64xbf16>
    %178 = arith.mulf %177, %22 : vector<16x64xbf16>
    %179 = vector.extract_strided_slice %175 {offsets = [0, 0], sizes = [8, 32], strides = [1, 1]} : vector<16x32xf32> to vector<8x32xf32>
    %180 = vector.extract_strided_slice %175 {offsets = [8, 0], sizes = [8, 32], strides = [1, 1]} : vector<16x32xf32> to vector<8x32xf32>
    %cst_23 = arith.constant dense<0.000000e+00> : vector<16x128xf32>
    %181 = tpu.matmul %178, %6, %cst_23 {dimension_numbers = #tpu.dot_dimension_numbers<[1], [0], [0], [1], [0, 0, 1, 1], [], []>} : vector<16x64xbf16>, vector<64x128xbf16>, vector<16x128xf32> -> vector<16x128xf32>
    %182 = vector.extract_strided_slice %5 {offsets = [48, 0], sizes = [8, 128], strides = [1, 1]} : vector<64x256xf32> to vector<8x128xf32>
    %183 = vector.extract_strided_slice %5 {offsets = [8, 128], sizes = [8, 128], strides = [1, 1]} : vector<64x256xf32> to vector<8x128xf32>
    %184 = tpu.concatenate %182, %183 in 0 : vector<8x128xf32>, vector<8x128xf32> -> vector<16x128xf32>
    %185 = arith.addf %181, %184 : vector<16x128xf32>
    %186 = vector.extract_strided_slice %185 {offsets = [0, 0], sizes = [16, 96], strides = [1, 1]} : vector<16x128xf32> to vector<16x96xf32>
    %187 = arith.negf %186 : vector<16x96xf32>
    %188 = math.exp %187 : vector<16x96xf32>
    %cst_24 = arith.constant 1.000000e+00 : f32
    %189 = vector.broadcast %cst_24 : f32 to vector<16x96xf32>
    %190 = arith.addf %189, %188 : vector<16x96xf32>
    %191 = arith.divf %189, %190 : vector<16x96xf32>
    %192 = vector.extract_strided_slice %191 {offsets = [0, 0], sizes = [16, 32], strides = [1, 1]} : vector<16x96xf32> to vector<16x32xf32>
    %193 = vector.extract_strided_slice %191 {offsets = [0, 32], sizes = [16, 32], strides = [1, 1]} : vector<16x96xf32> to vector<16x32xf32>
    %194 = vector.extract_strided_slice %191 {offsets = [0, 64], sizes = [16, 32], strides = [1, 1]} : vector<16x96xf32> to vector<16x32xf32>
    %195 = vector.extract_strided_slice %185 {offsets = [0, 96], sizes = [16, 32], strides = [1, 1]} : vector<16x128xf32> to vector<16x32xf32>
    %196 = math.tanh %195 : vector<16x32xf32>
    %197 = arith.mulf %193, %173 : vector<16x32xf32>
    %198 = arith.mulf %192, %196 : vector<16x32xf32>
    %199 = arith.addf %197, %198 : vector<16x32xf32>
    %200 = math.tanh %199 : vector<16x32xf32>
    %201 = arith.mulf %194, %200 : vector<16x32xf32>
    %202 = arith.truncf %201 : vector<16x32xf32> to vector<16x32xbf16>
    %203 = tpu.concatenate %202, %202 in 1 : vector<16x32xbf16>, vector<16x32xbf16> -> vector<16x64xbf16>
    %204 = arith.mulf %203, %22 : vector<16x64xbf16>
    %205 = vector.extract_strided_slice %201 {offsets = [0, 0], sizes = [8, 32], strides = [1, 1]} : vector<16x32xf32> to vector<8x32xf32>
    %206 = vector.extract_strided_slice %201 {offsets = [8, 0], sizes = [8, 32], strides = [1, 1]} : vector<16x32xf32> to vector<8x32xf32>
    %cst_25 = arith.constant dense<0.000000e+00> : vector<16x128xf32>
    %207 = tpu.matmul %204, %6, %cst_25 {dimension_numbers = #tpu.dot_dimension_numbers<[1], [0], [0], [1], [0, 0, 1, 1], [], []>} : vector<16x64xbf16>, vector<64x128xbf16>, vector<16x128xf32> -> vector<16x128xf32>
    %208 = vector.extract_strided_slice %5 {offsets = [56, 0], sizes = [8, 128], strides = [1, 1]} : vector<64x256xf32> to vector<8x128xf32>
    %209 = vector.extract_strided_slice %5 {offsets = [0, 128], sizes = [8, 128], strides = [1, 1]} : vector<64x256xf32> to vector<8x128xf32>
    %210 = tpu.concatenate %208, %209 in 0 : vector<8x128xf32>, vector<8x128xf32> -> vector<16x128xf32>
    %211 = arith.addf %207, %210 : vector<16x128xf32>
    %212 = vector.extract_strided_slice %211 {offsets = [0, 0], sizes = [16, 96], strides = [1, 1]} : vector<16x128xf32> to vector<16x96xf32>
    %213 = arith.negf %212 : vector<16x96xf32>
    %214 = math.exp %213 : vector<16x96xf32>
    %cst_26 = arith.constant 1.000000e+00 : f32
    %215 = vector.broadcast %cst_26 : f32 to vector<16x96xf32>
    %216 = arith.addf %215, %214 : vector<16x96xf32>
    %217 = arith.divf %215, %216 : vector<16x96xf32>
    %218 = vector.extract_strided_slice %217 {offsets = [0, 0], sizes = [16, 32], strides = [1, 1]} : vector<16x96xf32> to vector<16x32xf32>
    %219 = vector.extract_strided_slice %217 {offsets = [0, 32], sizes = [16, 32], strides = [1, 1]} : vector<16x96xf32> to vector<16x32xf32>
    %220 = vector.extract_strided_slice %217 {offsets = [0, 64], sizes = [16, 32], strides = [1, 1]} : vector<16x96xf32> to vector<16x32xf32>
    %221 = vector.extract_strided_slice %211 {offsets = [0, 96], sizes = [16, 32], strides = [1, 1]} : vector<16x128xf32> to vector<16x32xf32>
    %222 = math.tanh %221 : vector<16x32xf32>
    %223 = arith.mulf %219, %199 : vector<16x32xf32>
    %224 = arith.mulf %218, %222 : vector<16x32xf32>
    %225 = arith.addf %223, %224 : vector<16x32xf32>
    %226 = math.tanh %225 : vector<16x32xf32>
    %227 = arith.mulf %220, %226 : vector<16x32xf32>
    %228 = vector.extract_strided_slice %227 {offsets = [0, 0], sizes = [8, 32], strides = [1, 1]} : vector<16x32xf32> to vector<8x32xf32>
    %229 = vector.extract_strided_slice %227 {offsets = [8, 0], sizes = [8, 32], strides = [1, 1]} : vector<16x32xf32> to vector<8x32xf32>
    %230 = tpu.concatenate %49, %229 in 1 : vector<8x32xf32>, vector<8x32xf32> -> vector<8x64xf32>
    %231 = tpu.concatenate %75, %206 in 1 : vector<8x32xf32>, vector<8x32xf32> -> vector<8x64xf32>
    %232 = tpu.concatenate %101, %180 in 1 : vector<8x32xf32>, vector<8x32xf32> -> vector<8x64xf32>
    %233 = tpu.concatenate %127, %154 in 1 : vector<8x32xf32>, vector<8x32xf32> -> vector<8x64xf32>
    %234 = tpu.concatenate %153, %128 in 1 : vector<8x32xf32>, vector<8x32xf32> -> vector<8x64xf32>
    %235 = tpu.concatenate %179, %102 in 1 : vector<8x32xf32>, vector<8x32xf32> -> vector<8x64xf32>
    %236 = tpu.concatenate %205, %76 in 1 : vector<8x32xf32>, vector<8x32xf32> -> vector<8x64xf32>
    %237 = tpu.concatenate %228, %50 in 1 : vector<8x32xf32>, vector<8x32xf32> -> vector<8x64xf32>
    %238 = vector.shape_cast %230 : vector<8x64xf32> to vector<1x8x64xf32>
    %239 = vector.shape_cast %231 : vector<8x64xf32> to vector<1x8x64xf32>
    %240 = vector.shape_cast %232 : vector<8x64xf32> to vector<1x8x64xf32>
    %241 = vector.shape_cast %233 : vector<8x64xf32> to vector<1x8x64xf32>
    %242 = vector.shape_cast %234 : vector<8x64xf32> to vector<1x8x64xf32>
    %243 = vector.shape_cast %235 : vector<8x64xf32> to vector<1x8x64xf32>
    %244 = vector.shape_cast %236 : vector<8x64xf32> to vector<1x8x64xf32>
    %245 = vector.shape_cast %237 : vector<8x64xf32> to vector<1x8x64xf32>
    %246 = tpu.concatenate %238, %239, %240, %241, %242, %243, %244, %245 in 0 : vector<1x8x64xf32>, vector<1x8x64xf32>, vector<1x8x64xf32>, vector<1x8x64xf32>, vector<1x8x64xf32>, vector<1x8x64xf32>, vector<1x8x64xf32>, vector<1x8x64xf32> -> vector<8x8x64xf32>
    %c0_27 = arith.constant 0 : index
    %c0_28 = arith.constant 0 : index
    %c0_29 = arith.constant 0 : index
    %247 = vector.load %arg4[%c0_27, %c0_28, %c0_29] : memref<8x8x64xf32, #tpu.memory_space<vmem>>, vector<8x8x64xf32>
    tpu.vector_store %arg4[%c0_27, %c0_28, %c0_29], %246 {strides = array<i32>} : memref<8x8x64xf32, #tpu.memory_space<vmem>>, vector<8x8x64xf32>,
    return
  }
}

</mosaic_0001>

<llo_original>
// kernel: tpu_custom_call.1
$region0: #{tpu_custom_call.1}
  #allocation0 [shape = 'u32[]', space=smem, size = 0x4, offset = 0x4, fixed_abs, tag = 'smem constant byte address 0x4 - core index']
  #allocation1 [shape = 'u32[144,128]{1,0:T(1,128)}', space=vmem, size = 0x12000, scoped, tag = 'internal scratch']
  %s0 = inlined_call_operand.vmem [shape: bf16[64,16], index: 0, kind: input, shape index: {}]
  %s1 = inlined_call_operand.hbm [shape: bf16[16,256], index: 1, kind: input, shape index: {}]
  %s2 = inlined_call_operand.vmem [shape: bf16[64,128], index: 2, kind: input, shape index: {}]
  %s3 = inlined_call_operand.vmem [shape: f32[1,256], index: 3, kind: input, shape index: {}]
  %s4 = inlined_call_operand.hbm [shape: f32[8,8,64], index: 4, kind: output, shape index: {}]
  %s5 = sld [smem:[#allocation0]]
  $region30: #{tpu_custom_call.1} parent=0
    _
  %s7 = ssub.s32 1, %s5
  %s8 = scalar_select 0, %s7, %s5
  $region1: #{tpu_custom_call.1} parent=0
    #allocation2 [shape = 'u8[8192]{0}', space=vmem, size = 0x2000, scoped, tag = 'input window, operand 1, single buffered']
    #allocation3 [shape = 's32[1]{0}', space=sflag, size = 0x4, scoped, tag = 'scoped memory for tpu_custom_call.1']
    #allocation4 [shape = 's32[1]{0}', space=sflag, size = 0x4, scoped, tag = 'scoped memory for tpu_custom_call.1']
    #allocation5 [shape = 'u8[32768]{0}', space=vmem, size = 0x8000, scoped, tag = 'output window, operand 0, single buffered']
    %9 = vsyncpa [#allocation3], 0
    %10 = vsyncpa [#allocation4], 0
    // Predicated region
    $region2: #{tpu_custom_call.1} parent=1 // pred_check
      _
    $region3: #{tpu_custom_call.1} parent=1 // pred_check_branch
      %12 = sbr.rel (0) target = $region5
    $region4: #{tpu_custom_call.1} parent=1 // pred_region
      _
    $region5: #{tpu_custom_call.1} parent=1 // pred_fallthru
      _
    // Predicated region
    $region6: #{tpu_custom_call.1} parent=1 // pred_check
      _
    $region7: #{tpu_custom_call.1} parent=1 // pred_check_branch
      %14 = sbr.rel (0) target = $region9
    $region8: #{tpu_custom_call.1} parent=1 // pred_region
      %s16 = ssub.s32 256, 256
      %17 = vsyncadd [#allocation3], %s16
      %s18 = sshll.u32 [#allocation2], 4
      %s19 = int_to_ptr.vmem [resolvable:$true] %s18
      %24 = dma.hbm_to_vmem [thread:$0]  %s1, 256, %s19, [#allocation3], 128, 128, 8
    $region9: #{tpu_custom_call.1} parent=1 // pred_fallthru
      _
    // Predicated region
    $region10: #{tpu_custom_call.1} parent=1 // pred_check
      _
    $region11: #{tpu_custom_call.1} parent=1 // pred_check_branch
      %26 = sbr.rel (0) target = $region13
    $region12: #{tpu_custom_call.1} parent=1 // pred_region
      _
    $region13: #{tpu_custom_call.1} parent=1 // pred_fallthru
      _
    // Predicated region
    $region14: #{tpu_custom_call.1} parent=1 // pred_check
      _
    $region15: #{tpu_custom_call.1} parent=1 // pred_check_branch
      %28 = sbr.rel (0) target = $region17
    $region16: #{tpu_custom_call.1} parent=1 // pred_region
      _
    $region17: #{tpu_custom_call.1} parent=1 // pred_fallthru
      _
    // Predicated region
    $region18: #{tpu_custom_call.1} parent=1 // pred_check
      _
    $region19: #{tpu_custom_call.1} parent=1 // pred_check_branch
      %30 = sbr.rel (0) target = $region21
    $region20: #{tpu_custom_call.1} parent=1 // pred_region
      %31 = dma.done [#allocation3], 256
    $region21: #{tpu_custom_call.1} parent=1 // pred_fallthru
      _
    %v33 = vld [vmem:[%s0] sm:$0xf]
    %v34 = vld [vmem:[%s0 + $0x4] sm:$0xf]
    %v35 = vld [vmem:[%s0 + $0x8] sm:$0xf]
    %v36 = vld [vmem:[%s0 + $0xc] sm:$0xf]
    %v37 = vld [vmem:[%s0 + $0x10] sm:$0xf]
    %v38 = vld [vmem:[%s0 + $0x14] sm:$0xf]
    %v39 = vld [vmem:[%s0 + $0x18] sm:$0xf]
    %v40 = vld [vmem:[%s0 + $0x1c] sm:$0xf]
    %v41 = vld [vmem:[#allocation2] sm:$0xff]
    %v42 = vld [vmem:[#allocation2 + $0x8] sm:$0xff]
    %v43 = vld [vmem:[%s3] sm:$0x3]
    %v45 = vlaneseq
    %v46 = vshrl.u32 %v45, 7
    %v47 = vsub.s32 0, %v46
    %v48 = vrot.slane %v43, %v47
    %v49 = vlaneseq
    %v50 = vshrl.u32 %v49, 7
    %v51 = vsub.s32 1, %v50
    %v52 = vrot.slane %v43, %v51
    %v63 = vunpack.c.l.b16 %v33
    %v64 = vunpack.c.l.b16 %v34
    %v65 = vunpack.c.l.b16 %v35
    %v66 = vunpack.c.l.b16 %v36
    %v67 = vunpack.c.l.b16 %v37
    %v68 = vunpack.c.l.b16 %v38
    %v69 = vunpack.c.l.b16 %v39
    %v70 = vunpack.c.l.b16 %v40
    %v71 = vpack.c.b16 %v64, %v63
    %v72 = vpack.c.b16 %v66, %v65
    %v73 = vpack.c.b16 %v68, %v67
    %v74 = vpack.c.b16 %v70, %v69
    %v77 = vunpack.c.l.b16 %v41
    %v78 = vunpack.c.h.b16 %v41
    %v79 = vunpack.c.l.b16 %v42
    %v80 = vunpack.c.h.b16 %v42
    %v81 = vpack.c.b16 %v79, %v77
    %v82 = vpack.c.b16 %v80, %v78
    %vm85 = vcmask 130048
    %v87 = vsel %vm85, %v71, 0
    %v90 = vsel %vm85, %v72, 0
    %v93 = vsel %vm85, %v73, 0
    %v96 = vsel %vm85, %v74, 0
    %98 = vmatprep.subr.bf16.mxu0 %v82
    %99 = vmatpush1.bf16.msra.mxu0 %v81
    %100 = vmatprep.subr.bf16.mxu0 0
    %101 = vmatpush1.bf16.msra.mxu0 0
    %102 = vmatprep.subr.bf16.mxu0 0
    %103 = vmatpush1.bf16.msra.mxu0 0
    %104 = vmatprep.subr.bf16.mxu0 0
    %105 = vmatpush1.bf16.msra.mxu0 0
    %106 = vmatprep.subr.bf16.mxu0 0
    %107 = vmatpush1.bf16.msra.mxu0 0
    %108 = vmatprep.subr.bf16.mxu0 0
    %109 = vmatpush1.bf16.msra.mxu0 0
    %110 = vmatprep.subr.bf16.mxu0 0
    %111 = vmatpush1.bf16.msra.mxu0 0
    %112 = vmatprep.subr.bf16.mxu0 0
    %113 = vmatpush1.bf16.msra.mxu0 0
    %114 = vmatprep.subr.bf16.mxu0 0
    %115 = vmatpush1.bf16.msra.mxu0 0
    %116 = vmatprep.subr.bf16.mxu0 0
    %117 = vmatpush1.bf16.msra.mxu0 0
    %118 = vmatprep.subr.bf16.mxu0 0
    %119 = vmatpush1.bf16.msra.mxu0 0
    %120 = vmatprep.subr.bf16.mxu0 0
    %121 = vmatpush1.bf16.msra.mxu0 0
    %122 = vmatprep.subr.bf16.mxu0 0
    %123 = vmatpush1.bf16.msra.mxu0 0
    %124 = vmatprep.subr.bf16.mxu0 0
    %125 = vmatpush1.bf16.msra.mxu0 0
    %126 = vmatprep.subr.bf16.mxu0 0
    %127 = vmatpush1.bf16.msra.mxu0 0
    %128 = vmatprep.subr.bf16.mxu0 0
    %129 = vmatpush1.bf16.msra.mxu0 0
    %130 = vmatprep.mubr.bf16.mxu0 0
    %131 = vmatmul.mubr.bf16.gmra.mrb[0].mxu0 %v87
    %v132 = vpop.f32.mrb[0].mxu0
    %v133 = vadd.f32 %v48, %v132
    %v134 = vpop.f32.mrb[0].mxu0
    %v135 = vadd.f32 %v52, %v134
    %v136 = vpop.f32.mrb[0].mxu0
    %v137 = vadd.f32 %v48, %v136
    %v138 = vpop.f32.mrb[0].mxu0
    %v139 = vadd.f32 %v52, %v138
    %140 = vmatprep.mubr.bf16.mxu0 0
    %141 = vmatmul.mubr.bf16.gmra.mrb[0].mxu0 %v90
    %v142 = vpop.f32.mrb[0].mxu0
    %v143 = vadd.f32 %v48, %v142
    %v144 = vpop.f32.mrb[0].mxu0
    %v145 = vadd.f32 %v52, %v144
    %v146 = vpop.f32.mrb[0].mxu0
    %v147 = vadd.f32 %v48, %v146
    %v148 = vpop.f32.mrb[0].mxu0
    %v149 = vadd.f32 %v52, %v148
    %150 = vmatprep.mubr.bf16.mxu0 0
    %151 = vmatmul.mubr.bf16.gmra.mrb[0].mxu0 %v93
    %v152 = vpop.f32.mrb[0].mxu0
    %v153 = vadd.f32 %v48, %v152
    %v154 = vpop.f32.mrb[0].mxu0
    %v155 = vadd.f32 %v52, %v154
    %v156 = vpop.f32.mrb[0].mxu0
    %v157 = vadd.f32 %v48, %v156
    %v158 = vpop.f32.mrb[0].mxu0
    %v159 = vadd.f32 %v52, %v158
    %160 = vmatprep.mubr.bf16.mxu0 0
    %161 = vmatmul.mubr.bf16.gmra.mrb[0].mxu0 %v96
    %v162 = vpop.f32.mrb[0].mxu0
    %v163 = vadd.f32 %v48, %v162
    %v164 = vpop.f32.mrb[0].mxu0
    %v165 = vadd.f32 %v52, %v164
    %v166 = vpop.f32.mrb[0].mxu0
    %v167 = vadd.f32 %v48, %v166
    %v168 = vpop.f32.mrb[0].mxu0
    %v169 = vadd.f32 %v52, %v168
    %170 = vdwg.mxu0
    %v171 = vld [vmem:[%s2] sm:$0xf]
    %v172 = vld [vmem:[%s2 + $0x4] sm:$0xf]
    %v173 = vld [vmem:[%s2 + $0x8] sm:$0xf]
    %v174 = vld [vmem:[%s2 + $0xc] sm:$0xf]
    %v175 = vld [vmem:[%s2 + $0x10] sm:$0xf]
    %v176 = vld [vmem:[%s2 + $0x14] sm:$0xf]
    %v177 = vld [vmem:[%s2 + $0x18] sm:$0xf]
    %v178 = vld [vmem:[%s2 + $0x1c] sm:$0xf]
    %v179 = vlaneseq
    %v180 = vshrl.u32 %v179, 7
    %v181 = vadd.s32 %v180, 8
    %v182 = vlaneseq
    %v183 = vand.u32 %v182, 127
    %vm184 = vcmp.lt.s32.totalorder %v180, 8
    %vm185 = vcmp.lt.s32.totalorder %v181, 8
    %vm186 = vcmp.lt.s32.totalorder %v183, 32
    %vm187 = vmand %vm184, %vm186
    %vm188 = vmand %vm185, %vm186
    %vm189 = vcmp.ge.s32.totalorder %v180, 8
    %vm190 = vcmp.ge.s32.totalorder %v181, 8
    %vm191 = vcmp.ge.s32.totalorder %v183, 32
    %vm192 = vmand %vm189, %vm191
    %vm193 = vmand %vm190, %vm191
    %vm194 = vmor %vm187, %vm192
    %vm195 = vmor %vm188, %vm193
    %v196 = vsel %vm194, 1, 0
    %v197 = vsel %vm195, 1, 0
    %v198 = vcvt.s32.f32 %v196
    %v199 = vcvt.s32.f32 %v197
    %v200 = vpack.c.bf16 %v199, %v198
    %v209 = vunpack.c.l.b16 %v171
    %v210 = vunpack.c.l.b16 %v172
    %v211 = vunpack.c.l.b16 %v173
    %v212 = vunpack.c.l.b16 %v174
    %v213 = vunpack.c.l.b16 %v175
    %v214 = vunpack.c.l.b16 %v176
    %v215 = vunpack.c.l.b16 %v177
    %v216 = vunpack.c.l.b16 %v178
    %v217 = vpack.c.b16 %v210, %v209
    %v218 = vpack.c.b16 %v212, %v211
    %v219 = vpack.c.b16 %v214, %v213
    %v220 = vpack.c.b16 %v216, %v215
    %vm225 = vcmask 523264
    %v227 = vsel %vm225, 0, 0
    %229 = vmatprep.subr.bf16.mxu0 0
    %230 = vmatpush1.bf16.msra.mxu0 %v217
    %231 = vmatprep.subr.bf16.mxu0 0
    %232 = vmatpush1.bf16.msra.mxu0 %v218
    %233 = vmatprep.subr.bf16.mxu0 0
    %234 = vmatpush1.bf16.msra.mxu0 %v219
    %235 = vmatprep.subr.bf16.mxu0 0
    %236 = vmatpush1.bf16.msra.mxu0 %v220
    %237 = vmatprep.subr.bf16.mxu0 0
    %238 = vmatpush1.bf16.msra.mxu0 0
    %239 = vmatprep.subr.bf16.mxu0 0
    %240 = vmatpush1.bf16.msra.mxu0 0
    %241 = vmatprep.subr.bf16.mxu0 0
    %242 = vmatpush1.bf16.msra.mxu0 0
    %243 = vmatprep.subr.bf16.mxu0 0
    %244 = vmatpush1.bf16.msra.mxu0 0
    %245 = vmatprep.subr.bf16.mxu0 0
    %246 = vmatpush1.bf16.msra.mxu0 0
    %247 = vmatprep.subr.bf16.mxu0 0
    %248 = vmatpush1.bf16.msra.mxu0 0
    %249 = vmatprep.subr.bf16.mxu0 0
    %250 = vmatpush1.bf16.msra.mxu0 0
    %251 = vmatprep.subr.bf16.mxu0 0
    %252 = vmatpush1.bf16.msra.mxu0 0
    %253 = vmatprep.subr.bf16.mxu0 0
    %254 = vmatpush1.bf16.msra.mxu0 0
    %255 = vmatprep.subr.bf16.mxu0 0
    %256 = vmatpush1.bf16.msra.mxu0 0
    %257 = vmatprep.subr.bf16.mxu0 0
    %258 = vmatpush1.bf16.msra.mxu0 0
    %259 = vmatprep.subr.bf16.mxu0 0
    %260 = vmatpush1.bf16.msra.mxu0 0
    %261 = vmatprep.mubr.bf16.mxu0 0
    %262 = vmatmul.mubr.bf16.gmra.mrb[0].mxu0 %v227
    %v263 = vpop.f32.mrb[0].mxu0
    %v264 = vadd.f32 %v133, %v263
    %v265 = vpop.f32.mrb[0].mxu0
    %v266 = vpop.f32.mrb[0].mxu0
    %v267 = vadd.f32 %v169, %v266
    %v268 = vpop.f32.mrb[0].mxu0
    %269 = vdwg.mxu0
    %v270 = vxor.u32 %v264, 2147483648
    %v271 = vxor.u32 %v267, 2147483648
    %v272 = vmul.f32 %v270, 1.442695
    %v273 = vpow.pop %v272
    %v274 = vmul.f32 %v271, 1.442695
    %v275 = vpow.pop %v274
    %v276 = vadd.f32 %v273, 1.0
    %v277 = vadd.f32 %v275, 1.0
    %v278 = vrcp.pop %v276
    %v279 = vmul.f32 1.0, %v278
    %v280 = vrcp.pop %v277
    %v281 = vmul.f32 1.0, %v280
    %v282 = vtanh.pop %v264
    %v283 = vtanh.pop %v267
    %v284 = vmul.f32 %v279, 0.0
    %v285 = vmul.f32 %v281, 0.0
    %288 = vrot.lane.b32.xlu0 %v282, 32
    %v289 = vpop.permute.xlu0 %288
    %290 = vrot.lane.b32.xlu0 %v283, 32
    %v291 = vpop.permute.xlu0 %290
    %v294 = vmul.f32 %v279, %v289
    %v295 = vmul.f32 %v281, %v291
    %298 = vrot.lane.b32.xlu0 %v294, 32
    %v299 = vpop.permute.xlu0 %298
    %300 = vrot.lane.b32.xlu0 %v295, 32
    %v301 = vpop.permute.xlu0 %300
    %v304 = vadd.f32 %v284, %v299
    %v305 = vadd.f32 %v285, %v301
    %v306 = vtanh.pop %v304
    %v307 = vtanh.pop %v305
    %310 = vrot.lane.b32.xlu0 %v306, 32
    %v311 = vpop.permute.xlu0 %310
    %312 = vrot.lane.b32.xlu0 %v307, 32
    %v313 = vpop.permute.xlu0 %312
    %v316 = vmul.f32 %v279, %v311
    %v317 = vmul.f32 %v281, %v313
    %v318 = vpack.c.bf16 %v317, %v316
    %320 = vrot.lane.b32.xlu0 %v318, 64
    %v321 = vpop.permute.xlu0 %320
    %322 = vrot.lane.b32.xlu0 %v318, 96
    %v323 = vpop.permute.xlu0 %322
    %vm324 = vcmask 261120
    %v327 = vsel %vm324, %v321, %v323
    %v329 = vmul.bf16 %v327, %v200
    %v331 = vsel %vm225, %v329, 0
    %333 = vmatprep.subr.bf16.mxu0 0
    %334 = vmatpush1.bf16.msra.mxu0 %v217
    %335 = vmatprep.subr.bf16.mxu0 0
    %336 = vmatpush1.bf16.msra.mxu0 %v218
    %337 = vmatprep.subr.bf16.mxu0 0
    %338 = vmatpush1.bf16.msra.mxu0 %v219
    %339 = vmatprep.subr.bf16.mxu0 0
    %340 = vmatpush1.bf16.msra.mxu0 %v220
    %341 = vmatprep.subr.bf16.mxu0 0
    %342 = vmatpush1.bf16.msra.mxu0 0
    %343 = vmatprep.subr.bf16.mxu0 0
    %344 = vmatpush1.bf16.msra.mxu0 0
    %345 = vmatprep.subr.bf16.mxu0 0
    %346 = vmatpush1.bf16.msra.mxu0 0
    %347 = vmatprep.subr.bf16.mxu0 0
    %348 = vmatpush1.bf16.msra.mxu0 0
    %349 = vmatprep.subr.bf16.mxu0 0
    %350 = vmatpush1.bf16.msra.mxu0 0
    %351 = vmatprep.subr.bf16.mxu0 0
    %352 = vmatpush1.bf16.msra.mxu0 0
    %353 = vmatprep.subr.bf16.mxu0 0
    %354 = vmatpush1.bf16.msra.mxu0 0
    %355 = vmatprep.subr.bf16.mxu0 0
    %356 = vmatpush1.bf16.msra.mxu0 0
    %357 = vmatprep.subr.bf16.mxu0 0
    %358 = vmatpush1.bf16.msra.mxu0 0
    %359 = vmatprep.subr.bf16.mxu0 0
    %360 = vmatpush1.bf16.msra.mxu0 0
    %361 = vmatprep.subr.bf16.mxu0 0
    %362 = vmatpush1.bf16.msra.mxu0 0
    %363 = vmatprep.subr.bf16.mxu0 0
    %364 = vmatpush1.bf16.msra.mxu0 0
    %365 = vmatprep.mubr.bf16.mxu0 0
    %366 = vmatmul.mubr.bf16.gmra.mrb[0].mxu0 %v331
    %v367 = vpop.f32.mrb[0].mxu0
    %v368 = vadd.f32 %v137, %v367
    %v369 = vpop.f32.mrb[0].mxu0
    %v370 = vpop.f32.mrb[0].mxu0
    %v371 = vadd.f32 %v165, %v370
    %v372 = vpop.f32.mrb[0].mxu0
    %373 = vdwg.mxu0
    %v374 = vxor.u32 %v368, 2147483648
    %v375 = vxor.u32 %v371, 2147483648
    %v376 = vmul.f32 %v374, 1.442695
    %v377 = vpow.pop %v376
    %v378 = vmul.f32 %v375, 1.442695
    %v379 = vpow.pop %v378
    %v380 = vadd.f32 %v377, 1.0
    %v381 = vadd.f32 %v379, 1.0
    %v382 = vrcp.pop %v380
    %v383 = vmul.f32 1.0, %v382
    %v384 = vrcp.pop %v381
    %v385 = vmul.f32 1.0, %v384
    %v386 = vtanh.pop %v368
    %v387 = vtanh.pop %v371
    %v388 = vmul.f32 %v383, %v304
    %v389 = vmul.f32 %v385, %v305
    %392 = vrot.lane.b32.xlu0 %v386, 32
    %v393 = vpop.permute.xlu0 %392
    %394 = vrot.lane.b32.xlu0 %v387, 32
    %v395 = vpop.permute.xlu0 %394
    %v398 = vmul.f32 %v383, %v393
    %v399 = vmul.f32 %v385, %v395
    %402 = vrot.lane.b32.xlu0 %v398, 32
    %v403 = vpop.permute.xlu0 %402
    %404 = vrot.lane.b32.xlu0 %v399, 32
    %v405 = vpop.permute.xlu0 %404
    %v408 = vadd.f32 %v388, %v403
    %v409 = vadd.f32 %v389, %v405
    %v410 = vtanh.pop %v408
    %v411 = vtanh.pop %v409
    %414 = vrot.lane.b32.xlu0 %v410, 32
    %v415 = vpop.permute.xlu0 %414
    %416 = vrot.lane.b32.xlu0 %v411, 32
    %v417 = vpop.permute.xlu0 %416
    %v420 = vmul.f32 %v383, %v415
    %v421 = vmul.f32 %v385, %v417
    %v422 = vpack.c.bf16 %v421, %v420
    %424 = vrot.lane.b32.xlu0 %v422, 64
    %v425 = vpop.permute.xlu0 %424
    %426 = vrot.lane.b32.xlu0 %v422, 96
    %v427 = vpop.permute.xlu0 %426
    %v430 = vsel %vm324, %v425, %v427
    %v432 = vmul.bf16 %v430, %v200
    %v434 = vsel %vm225, %v432, 0
    %436 = vmatprep.subr.bf16.mxu0 0
    %437 = vmatpush1.bf16.msra.mxu0 %v217
    %438 = vmatprep.subr.bf16.mxu0 0
    %439 = vmatpush1.bf16.msra.mxu0 %v218
    %440 = vmatprep.subr.bf16.mxu0 0
    %441 = vmatpush1.bf16.msra.mxu0 %v219
    %442 = vmatprep.subr.bf16.mxu0 0
    %443 = vmatpush1.bf16.msra.mxu0 %v220
    %444 = vmatprep.subr.bf16.mxu0 0
    %445 = vmatpush1.bf16.msra.mxu0 0
    %446 = vmatprep.subr.bf16.mxu0 0
    %447 = vmatpush1.bf16.msra.mxu0 0
    %448 = vmatprep.subr.bf16.mxu0 0
    %449 = vmatpush1.bf16.msra.mxu0 0
    %450 = vmatprep.subr.bf16.mxu0 0
    %451 = vmatpush1.bf16.msra.mxu0 0
    %452 = vmatprep.subr.bf16.mxu0 0
    %453 = vmatpush1.bf16.msra.mxu0 0
    %454 = vmatprep.subr.bf16.mxu0 0
    %455 = vmatpush1.bf16.msra.mxu0 0
    %456 = vmatprep.subr.bf16.mxu0 0
    %457 = vmatpush1.bf16.msra.mxu0 0
    %458 = vmatprep.subr.bf16.mxu0 0
    %459 = vmatpush1.bf16.msra.mxu0 0
    %460 = vmatprep.subr.bf16.mxu0 0
    %461 = vmatpush1.bf16.msra.mxu0 0
    %462 = vmatprep.subr.bf16.mxu0 0
    %463 = vmatpush1.bf16.msra.mxu0 0
    %464 = vmatprep.subr.bf16.mxu0 0
    %465 = vmatpush1.bf16.msra.mxu0 0
    %466 = vmatprep.subr.bf16.mxu0 0
    %467 = vmatpush1.bf16.msra.mxu0 0
    %468 = vmatprep.mubr.bf16.mxu0 0
    %469 = vmatmul.mubr.bf16.gmra.mrb[0].mxu0 %v434
    %v470 = vpop.f32.mrb[0].mxu0
    %v471 = vadd.f32 %v143, %v470
    %v472 = vpop.f32.mrb[0].mxu0
    %v473 = vpop.f32.mrb[0].mxu0
    %v474 = vadd.f32 %v159, %v473
    %v475 = vpop.f32.mrb[0].mxu0
    %476 = vdwg.mxu0
    %v477 = vxor.u32 %v471, 2147483648
    %v478 = vxor.u32 %v474, 2147483648
    %v479 = vmul.f32 %v477, 1.442695
    %v480 = vpow.pop %v479
    %v481 = vmul.f32 %v478, 1.442695
    %v482 = vpow.pop %v481
    %v483 = vadd.f32 %v480, 1.0
    %v484 = vadd.f32 %v482, 1.0
    %v485 = vrcp.pop %v483
    %v486 = vmul.f32 1.0, %v485
    %v487 = vrcp.pop %v484
    %v488 = vmul.f32 1.0, %v487
    %v489 = vtanh.pop %v471
    %v490 = vtanh.pop %v474
    %v491 = vmul.f32 %v486, %v408
    %v492 = vmul.f32 %v488, %v409
    %495 = vrot.lane.b32.xlu0 %v489, 32
    %v496 = vpop.permute.xlu0 %495
    %497 = vrot.lane.b32.xlu0 %v490, 32
    %v498 = vpop.permute.xlu0 %497
    %v501 = vmul.f32 %v486, %v496
    %v502 = vmul.f32 %v488, %v498
    %505 = vrot.lane.b32.xlu0 %v501, 32
    %v506 = vpop.permute.xlu0 %505
    %507 = vrot.lane.b32.xlu0 %v502, 32
    %v508 = vpop.permute.xlu0 %507
    %v511 = vadd.f32 %v491, %v506
    %v512 = vadd.f32 %v492, %v508
    %v513 = vtanh.pop %v511
    %v514 = vtanh.pop %v512
    %517 = vrot.lane.b32.xlu0 %v513, 32
    %v518 = vpop.permute.xlu0 %517
    %519 = vrot.lane.b32.xlu0 %v514, 32
    %v520 = vpop.permute.xlu0 %519
    %v523 = vmul.f32 %v486, %v518
    %v524 = vmul.f32 %v488, %v520
    %v525 = vpack.c.bf16 %v524, %v523
    %527 = vrot.lane.b32.xlu0 %v525, 64
    %v528 = vpop.permute.xlu0 %527
    %529 = vrot.lane.b32.xlu0 %v525, 96
    %v530 = vpop.permute.xlu0 %529
    %v533 = vsel %vm324, %v528, %v530
    %v535 = vmul.bf16 %v533, %v200
    %v537 = vsel %vm225, %v535, 0
    %539 = vmatprep.subr.bf16.mxu0 0
    %540 = vmatpush1.bf16.msra.mxu0 %v217
    %541 = vmatprep.subr.bf16.mxu0 0
    %542 = vmatpush1.bf16.msra.mxu0 %v218
    %543 = vmatprep.subr.bf16.mxu0 0
    %544 = vmatpush1.bf16.msra.mxu0 %v219
    %545 = vmatprep.subr.bf16.mxu0 0
    %546 = vmatpush1.bf16.msra.mxu0 %v220
    %547 = vmatprep.subr.bf16.mxu0 0
    %548 = vmatpush1.bf16.msra.mxu0 0
    %549 = vmatprep.subr.bf16.mxu0 0
    %550 = vmatpush1.bf16.msra.mxu0 0
    %551 = vmatprep.subr.bf16.mxu0 0
    %552 = vmatpush1.bf16.msra.mxu0 0
    %553 = vmatprep.subr.bf16.mxu0 0
    %554 = vmatpush1.bf16.msra.mxu0 0
    %555 = vmatprep.subr.bf16.mxu0 0
    %556 = vmatpush1.bf16.msra.mxu0 0
    %557 = vmatprep.subr.bf16.mxu0 0
    %558 = vmatpush1.bf16.msra.mxu0 0
    %559 = vmatprep.subr.bf16.mxu0 0
    %560 = vmatpush1.bf16.msra.mxu0 0
    %561 = vmatprep.subr.bf16.mxu0 0
    %562 = vmatpush1.bf16.msra.mxu0 0
    %563 = vmatprep.subr.bf16.mxu0 0
    %564 = vmatpush1.bf16.msra.mxu0 0
    %565 = vmatprep.subr.bf16.mxu0 0
    %566 = vmatpush1.bf16.msra.mxu0 0
    %567 = vmatprep.subr.bf16.mxu0 0
    %568 = vmatpush1.bf16.msra.mxu0 0
    %569 = vmatprep.subr.bf16.mxu0 0
    %570 = vmatpush1.bf16.msra.mxu0 0
    %571 = vmatprep.mubr.bf16.mxu0 0
    %572 = vmatmul.mubr.bf16.gmra.mrb[0].mxu0 %v537
    %v573 = vpop.f32.mrb[0].mxu0
    %v574 = vadd.f32 %v147, %v573
    %v575 = vpop.f32.mrb[0].mxu0
    %v576 = vpop.f32.mrb[0].mxu0
    %v577 = vadd.f32 %v155, %v576
    %v578 = vpop.f32.mrb[0].mxu0
    %579 = vdwg.mxu0
    %v580 = vxor.u32 %v574, 2147483648
    %v581 = vxor.u32 %v577, 2147483648
    %v582 = vmul.f32 %v580, 1.442695
    %v583 = vpow.pop %v582
    %v584 = vmul.f32 %v581, 1.442695
    %v585 = vpow.pop %v584
    %v586 = vadd.f32 %v583, 1.0
    %v587 = vadd.f32 %v585, 1.0
    %v588 = vrcp.pop %v586
    %v589 = vmul.f32 1.0, %v588
    %v590 = vrcp.pop %v587
    %v591 = vmul.f32 1.0, %v590
    %v592 = vtanh.pop %v574
    %v593 = vtanh.pop %v577
    %v594 = vmul.f32 %v589, %v511
    %v595 = vmul.f32 %v591, %v512
    %598 = vrot.lane.b32.xlu0 %v592, 32
    %v599 = vpop.permute.xlu0 %598
    %600 = vrot.lane.b32.xlu0 %v593, 32
    %v601 = vpop.permute.xlu0 %600
    %v604 = vmul.f32 %v589, %v599
    %v605 = vmul.f32 %v591, %v601
    %608 = vrot.lane.b32.xlu0 %v604, 32
    %v609 = vpop.permute.xlu0 %608
    %610 = vrot.lane.b32.xlu0 %v605, 32
    %v611 = vpop.permute.xlu0 %610
    %v614 = vadd.f32 %v594, %v609
    %v615 = vadd.f32 %v595, %v611
    %v616 = vtanh.pop %v614
    %v617 = vtanh.pop %v615
    %620 = vrot.lane.b32.xlu0 %v616, 32
    %v621 = vpop.permute.xlu0 %620
    %622 = vrot.lane.b32.xlu0 %v617, 32
    %v623 = vpop.permute.xlu0 %622
    %v626 = vmul.f32 %v589, %v621
    %v627 = vmul.f32 %v591, %v623
    %v628 = vpack.c.bf16 %v627, %v626
    %630 = vrot.lane.b32.xlu0 %v628, 64
    %v631 = vpop.permute.xlu0 %630
    %632 = vrot.lane.b32.xlu0 %v628, 96
    %v633 = vpop.permute.xlu0 %632
    %v636 = vsel %vm324, %v631, %v633
    %v638 = vmul.bf16 %v636, %v200
    %v640 = vsel %vm225, %v638, 0
    %642 = vmatprep.subr.bf16.mxu0 0
    %643 = vmatpush1.bf16.msra.mxu0 %v217
    %644 = vmatprep.subr.bf16.mxu0 0
    %645 = vmatpush1.bf16.msra.mxu0 %v218
    %646 = vmatprep.subr.bf16.mxu0 0
    %647 = vmatpush1.bf16.msra.mxu0 %v219
    %648 = vmatprep.subr.bf16.mxu0 0
    %649 = vmatpush1.bf16.msra.mxu0 %v220
    %650 = vmatprep.subr.bf16.mxu0 0
    %651 = vmatpush1.bf16.msra.mxu0 0
    %652 = vmatprep.subr.bf16.mxu0 0
    %653 = vmatpush1.bf16.msra.mxu0 0
    %654 = vmatprep.subr.bf16.mxu0 0
    %655 = vmatpush1.bf16.msra.mxu0 0
    %656 = vmatprep.subr.bf16.mxu0 0
    %657 = vmatpush1.bf16.msra.mxu0 0
    %658 = vmatprep.subr.bf16.mxu0 0
    %659 = vmatpush1.bf16.msra.mxu0 0
    %660 = vmatprep.subr.bf16.mxu0 0
    %661 = vmatpush1.bf16.msra.mxu0 0
    %662 = vmatprep.subr.bf16.mxu0 0
    %663 = vmatpush1.bf16.msra.mxu0 0
    %664 = vmatprep.subr.bf16.mxu0 0
    %665 = vmatpush1.bf16.msra.mxu0 0
    %666 = vmatprep.subr.bf16.mxu0 0
    %667 = vmatpush1.bf16.msra.mxu0 0
    %668 = vmatprep.subr.bf16.mxu0 0
    %669 = vmatpush1.bf16.msra.mxu0 0
    %670 = vmatprep.subr.bf16.mxu0 0
    %671 = vmatpush1.bf16.msra.mxu0 0
    %672 = vmatprep.subr.bf16.mxu0 0
    %673 = vmatpush1.bf16.msra.mxu0 0
    %674 = vmatprep.mubr.bf16.mxu0 0
    %675 = vmatmul.mubr.bf16.gmra.mrb[0].mxu0 %v640
    %v676 = vpop.f32.mrb[0].mxu0
    %v677 = vadd.f32 %v153, %v676
    %v678 = vpop.f32.mrb[0].mxu0
    %v679 = vpop.f32.mrb[0].mxu0
    %v680 = vadd.f32 %v149, %v679
    %v681 = vpop.f32.mrb[0].mxu0
    %682 = vdwg.mxu0
    %v683 = vxor.u32 %v677, 2147483648
    %v684 = vxor.u32 %v680, 2147483648
    %v685 = vmul.f32 %v683, 1.442695
    %v686 = vpow.pop %v685
    %v687 = vmul.f32 %v684, 1.442695
    %v688 = vpow.pop %v687
    %v689 = vadd.f32 %v686, 1.0
    %v690 = vadd.f32 %v688, 1.0
    %v691 = vrcp.pop %v689
    %v692 = vmul.f32 1.0, %v691
    %v693 = vrcp.pop %v690
    %v694 = vmul.f32 1.0, %v693
    %v695 = vtanh.pop %v677
    %v696 = vtanh.pop %v680
    %v697 = vmul.f32 %v692, %v614
    %v698 = vmul.f32 %v694, %v615
    %701 = vrot.lane.b32.xlu0 %v695, 32
    %v702 = vpop.permute.xlu0 %701
    %703 = vrot.lane.b32.xlu0 %v696, 32
    %v704 = vpop.permute.xlu0 %703
    %v707 = vmul.f32 %v692, %v702
    %v708 = vmul.f32 %v694, %v704
    %711 = vrot.lane.b32.xlu0 %v707, 32
    %v712 = vpop.permute.xlu0 %711
    %713 = vrot.lane.b32.xlu0 %v708, 32
    %v714 = vpop.permute.xlu0 %713
    %v717 = vadd.f32 %v697, %v712
    %v718 = vadd.f32 %v698, %v714
    %v719 = vtanh.pop %v717
    %v720 = vtanh.pop %v718
    %723 = vrot.lane.b32.xlu0 %v719, 32
    %v724 = vpop.permute.xlu0 %723
    %725 = vrot.lane.b32.xlu0 %v720, 32
    %v726 = vpop.permute.xlu0 %725
    %v729 = vmul.f32 %v692, %v724
    %v730 = vmul.f32 %v694, %v726
    %v731 = vpack.c.bf16 %v730, %v729
    %733 = vrot.lane.b32.xlu0 %v731, 64
    %v734 = vpop.permute.xlu0 %733
    %735 = vrot.lane.b32.xlu0 %v731, 96
    %v736 = vpop.permute.xlu0 %735
    %v739 = vsel %vm324, %v734, %v736
    %v741 = vmul.bf16 %v739, %v200
    %v743 = vsel %vm225, %v741, 0
    %745 = vmatprep.subr.bf16.mxu0 0
    %746 = vmatpush1.bf16.msra.mxu0 %v217
    %747 = vmatprep.subr.bf16.mxu0 0
    %748 = vmatpush1.bf16.msra.mxu0 %v218
    %749 = vmatprep.subr.bf16.mxu0 0
    %750 = vmatpush1.bf16.msra.mxu0 %v219
    %751 = vmatprep.subr.bf16.mxu0 0
    %752 = vmatpush1.bf16.msra.mxu0 %v220
    %753 = vmatprep.subr.bf16.mxu0 0
    %754 = vmatpush1.bf16.msra.mxu0 0
    %755 = vmatprep.subr.bf16.mxu0 0
    %756 = vmatpush1.bf16.msra.mxu0 0
    %757 = vmatprep.subr.bf16.mxu0 0
    %758 = vmatpush1.bf16.msra.mxu0 0
    %759 = vmatprep.subr.bf16.mxu0 0
    %760 = vmatpush1.bf16.msra.mxu0 0
    %761 = vmatprep.subr.bf16.mxu0 0
    %762 = vmatpush1.bf16.msra.mxu0 0
    %763 = vmatprep.subr.bf16.mxu0 0
    %764 = vmatpush1.bf16.msra.mxu0 0
    %765 = vmatprep.subr.bf16.mxu0 0
    %766 = vmatpush1.bf16.msra.mxu0 0
    %767 = vmatprep.subr.bf16.mxu0 0
    %768 = vmatpush1.bf16.msra.mxu0 0
    %769 = vmatprep.subr.bf16.mxu0 0
    %770 = vmatpush1.bf16.msra.mxu0 0
    %771 = vmatprep.subr.bf16.mxu0 0
    %772 = vmatpush1.bf16.msra.mxu0 0
    %773 = vmatprep.subr.bf16.mxu0 0
    %774 = vmatpush1.bf16.msra.mxu0 0
    %775 = vmatprep.subr.bf16.mxu0 0
    %776 = vmatpush1.bf16.msra.mxu0 0
    %777 = vmatprep.mubr.bf16.mxu0 0
    %778 = vmatmul.mubr.bf16.gmra.mrb[0].mxu0 %v743
    %v779 = vpop.f32.mrb[0].mxu0
    %v780 = vadd.f32 %v157, %v779
    %v781 = vpop.f32.mrb[0].mxu0
    %v782 = vpop.f32.mrb[0].mxu0
    %v783 = vadd.f32 %v145, %v782
    %v784 = vpop.f32.mrb[0].mxu0
    %785 = vdwg.mxu0
    %v786 = vxor.u32 %v780, 2147483648
    %v787 = vxor.u32 %v783, 2147483648
    %v788 = vmul.f32 %v786, 1.442695
    %v789 = vpow.pop %v788
    %v790 = vmul.f32 %v787, 1.442695
    %v791 = vpow.pop %v790
    %v792 = vadd.f32 %v789, 1.0
    %v793 = vadd.f32 %v791, 1.0
    %v794 = vrcp.pop %v792
    %v795 = vmul.f32 1.0, %v794
    %v796 = vrcp.pop %v793
    %v797 = vmul.f32 1.0, %v796
    %v798 = vtanh.pop %v780
    %v799 = vtanh.pop %v783
    %v800 = vmul.f32 %v795, %v717
    %v801 = vmul.f32 %v797, %v718
    %804 = vrot.lane.b32.xlu0 %v798, 32
    %v805 = vpop.permute.xlu0 %804
    %806 = vrot.lane.b32.xlu0 %v799, 32
    %v807 = vpop.permute.xlu0 %806
    %v810 = vmul.f32 %v795, %v805
    %v811 = vmul.f32 %v797, %v807
    %814 = vrot.lane.b32.xlu0 %v810, 32
    %v815 = vpop.permute.xlu0 %814
    %816 = vrot.lane.b32.xlu0 %v811, 32
    %v817 = vpop.permute.xlu0 %816
    %v820 = vadd.f32 %v800, %v815
    %v821 = vadd.f32 %v801, %v817
    %v822 = vtanh.pop %v820
    %v823 = vtanh.pop %v821
    %826 = vrot.lane.b32.xlu0 %v822, 32
    %v827 = vpop.permute.xlu0 %826
    %828 = vrot.lane.b32.xlu0 %v823, 32
    %v829 = vpop.permute.xlu0 %828
    %v832 = vmul.f32 %v795, %v827
    %v833 = vmul.f32 %v797, %v829
    %v834 = vpack.c.bf16 %v833, %v832
    %836 = vrot.lane.b32.xlu0 %v834, 64
    %v837 = vpop.permute.xlu0 %836
    %838 = vrot.lane.b32.xlu0 %v834, 96
    %v839 = vpop.permute.xlu0 %838
    %v842 = vsel %vm324, %v837, %v839
    %v844 = vmul.bf16 %v842, %v200
    %v846 = vsel %vm225, %v844, 0
    %848 = vmatprep.subr.bf16.mxu0 0
    %849 = vmatpush1.bf16.msra.mxu0 %v217
    %850 = vmatprep.subr.bf16.mxu0 0
    %851 = vmatpush1.bf16.msra.mxu0 %v218
    %852 = vmatprep.subr.bf16.mxu0 0
    %853 = vmatpush1.bf16.msra.mxu0 %v219
    %854 = vmatprep.subr.bf16.mxu0 0
    %855 = vmatpush1.bf16.msra.mxu0 %v220
    %856 = vmatprep.subr.bf16.mxu0 0
    %857 = vmatpush1.bf16.msra.mxu0 0
    %858 = vmatprep.subr.bf16.mxu0 0
    %859 = vmatpush1.bf16.msra.mxu0 0
    %860 = vmatprep.subr.bf16.mxu0 0
    %861 = vmatpush1.bf16.msra.mxu0 0
    %862 = vmatprep.subr.bf16.mxu0 0
    %863 = vmatpush1.bf16.msra.mxu0 0
    %864 = vmatprep.subr.bf16.mxu0 0
    %865 = vmatpush1.bf16.msra.mxu0 0
    %866 = vmatprep.subr.bf16.mxu0 0
    %867 = vmatpush1.bf16.msra.mxu0 0
    %868 = vmatprep.subr.bf16.mxu0 0
    %869 = vmatpush1.bf16.msra.mxu0 0
    %870 = vmatprep.subr.bf16.mxu0 0
    %871 = vmatpush1.bf16.msra.mxu0 0
    %872 = vmatprep.subr.bf16.mxu0 0
    %873 = vmatpush1.bf16.msra.mxu0 0
    %874 = vmatprep.subr.bf16.mxu0 0
    %875 = vmatpush1.bf16.msra.mxu0 0
    %876 = vmatprep.subr.bf16.mxu0 0
    %877 = vmatpush1.bf16.msra.mxu0 0
    %878 = vmatprep.subr.bf16.mxu0 0
    %879 = vmatpush1.bf16.msra.mxu0 0
    %880 = vmatprep.mubr.bf16.mxu0 0
    %881 = vmatmul.mubr.bf16.gmra.mrb[0].mxu0 %v846
    %v882 = vpop.f32.mrb[0].mxu0
    %v883 = vadd.f32 %v163, %v882
    %v884 = vpop.f32.mrb[0].mxu0
    %v885 = vpop.f32.mrb[0].mxu0
    %v886 = vadd.f32 %v139, %v885
    %v887 = vpop.f32.mrb[0].mxu0
    %888 = vdwg.mxu0
    %v889 = vxor.u32 %v883, 2147483648
    %v890 = vxor.u32 %v886, 2147483648
    %v891 = vmul.f32 %v889, 1.442695
    %v892 = vpow.pop %v891
    %v893 = vmul.f32 %v890, 1.442695
    %v894 = vpow.pop %v893
    %v895 = vadd.f32 %v892, 1.0
    %v896 = vadd.f32 %v894, 1.0
    %v897 = vrcp.pop %v895
    %v898 = vmul.f32 1.0, %v897
    %v899 = vrcp.pop %v896
    %v900 = vmul.f32 1.0, %v899
    %v901 = vtanh.pop %v883
    %v902 = vtanh.pop %v886
    %v903 = vmul.f32 %v898, %v820
    %v904 = vmul.f32 %v900, %v821
    %907 = vrot.lane.b32.xlu0 %v901, 32
    %v908 = vpop.permute.xlu0 %907
    %909 = vrot.lane.b32.xlu0 %v902, 32
    %v910 = vpop.permute.xlu0 %909
    %v913 = vmul.f32 %v898, %v908
    %v914 = vmul.f32 %v900, %v910
    %917 = vrot.lane.b32.xlu0 %v913, 32
    %v918 = vpop.permute.xlu0 %917
    %919 = vrot.lane.b32.xlu0 %v914, 32
    %v920 = vpop.permute.xlu0 %919
    %v923 = vadd.f32 %v903, %v918
    %v924 = vadd.f32 %v904, %v920
    %v925 = vtanh.pop %v923
    %v926 = vtanh.pop %v924
    %929 = vrot.lane.b32.xlu0 %v925, 32
    %v930 = vpop.permute.xlu0 %929
    %931 = vrot.lane.b32.xlu0 %v926, 32
    %v932 = vpop.permute.xlu0 %931
    %v935 = vmul.f32 %v898, %v930
    %v936 = vmul.f32 %v900, %v932
    %v937 = vpack.c.bf16 %v936, %v935
    %939 = vrot.lane.b32.xlu0 %v937, 64
    %v940 = vpop.permute.xlu0 %939
    %941 = vrot.lane.b32.xlu0 %v937, 96
    %v942 = vpop.permute.xlu0 %941
    %v945 = vsel %vm324, %v940, %v942
    %v947 = vmul.bf16 %v945, %v200
    %v949 = vsel %vm225, %v947, 0
    %951 = vmatprep.subr.bf16.mxu0 0
    %952 = vmatpush1.bf16.msra.mxu0 %v217
    %953 = vmatprep.subr.bf16.mxu0 0
    %954 = vmatpush1.bf16.msra.mxu0 %v218
    %955 = vmatprep.subr.bf16.mxu0 0
    %956 = vmatpush1.bf16.msra.mxu0 %v219
    %957 = vmatprep.subr.bf16.mxu0 0
    %958 = vmatpush1.bf16.msra.mxu0 %v220
    %959 = vmatprep.subr.bf16.mxu0 0
    %960 = vmatpush1.bf16.msra.mxu0 0
    %961 = vmatprep.subr.bf16.mxu0 0
    %962 = vmatpush1.bf16.msra.mxu0 0
    %963 = vmatprep.subr.bf16.mxu0 0
    %964 = vmatpush1.bf16.msra.mxu0 0
    %965 = vmatprep.subr.bf16.mxu0 0
    %966 = vmatpush1.bf16.msra.mxu0 0
    %967 = vmatprep.subr.bf16.mxu0 0
    %968 = vmatpush1.bf16.msra.mxu0 0
    %969 = vmatprep.subr.bf16.mxu0 0
    %970 = vmatpush1.bf16.msra.mxu0 0
    %971 = vmatprep.subr.bf16.mxu0 0
    %972 = vmatpush1.bf16.msra.mxu0 0
    %973 = vmatprep.subr.bf16.mxu0 0
    %974 = vmatpush1.bf16.msra.mxu0 0
    %975 = vmatprep.subr.bf16.mxu0 0
    %976 = vmatpush1.bf16.msra.mxu0 0
    %977 = vmatprep.subr.bf16.mxu0 0
    %978 = vmatpush1.bf16.msra.mxu0 0
    %979 = vmatprep.subr.bf16.mxu0 0
    %980 = vmatpush1.bf16.msra.mxu0 0
    %981 = vmatprep.subr.bf16.mxu0 0
    %982 = vmatpush1.bf16.msra.mxu0 0
    %983 = vmatprep.mubr.bf16.mxu0 0
    %984 = vmatmul.mubr.bf16.gmra.mrb[0].mxu0 %v949
    %v985 = vpop.f32.mrb[0].mxu0
    %v986 = vadd.f32 %v167, %v985
    %v987 = vpop.f32.mrb[0].mxu0
    %v988 = vpop.f32.mrb[0].mxu0
    %v989 = vadd.f32 %v135, %v988
    %v990 = vpop.f32.mrb[0].mxu0
    %991 = vdwg.mxu0
    %v992 = vxor.u32 %v986, 2147483648
    %v993 = vxor.u32 %v989, 2147483648
    %v994 = vmul.f32 %v992, 1.442695
    %v995 = vpow.pop %v994
    %v996 = vmul.f32 %v993, 1.442695
    %v997 = vpow.pop %v996
    %v998 = vadd.f32 %v995, 1.0
    %v999 = vadd.f32 %v997, 1.0
    %v1000 = vrcp.pop %v998
    %v1001 = vmul.f32 1.0, %v1000
    %v1002 = vrcp.pop %v999
    %v1003 = vmul.f32 1.0, %v1002
    %v1004 = vtanh.pop %v986
    %v1005 = vtanh.pop %v989
    %v1006 = vmul.f32 %v1001, %v923
    %v1007 = vmul.f32 %v1003, %v924
    %1010 = vrot.lane.b32.xlu0 %v1004, 32
    %v1011 = vpop.permute.xlu0 %1010
    %1012 = vrot.lane.b32.xlu0 %v1005, 32
    %v1013 = vpop.permute.xlu0 %1012
    %v1016 = vmul.f32 %v1001, %v1011
    %v1017 = vmul.f32 %v1003, %v1013
    %1020 = vrot.lane.b32.xlu0 %v1016, 32
    %v1021 = vpop.permute.xlu0 %1020
    %1022 = vrot.lane.b32.xlu0 %v1017, 32
    %v1023 = vpop.permute.xlu0 %1022
    %v1026 = vadd.f32 %v1006, %v1021
    %v1027 = vadd.f32 %v1007, %v1023
    %v1028 = vtanh.pop %v1026
    %v1029 = vtanh.pop %v1027
    %1032 = vrot.lane.b32.xlu0 %v1028, 32
    %v1033 = vpop.permute.xlu0 %1032
    %1034 = vrot.lane.b32.xlu0 %v1029, 32
    %v1035 = vpop.permute.xlu0 %1034
    %v1038 = vmul.f32 %v1001, %v1033
    %v1039 = vmul.f32 %v1003, %v1035
    %1041 = vrot.lane.b32.xlu0 %v316, 64
    %v1042 = vpop.permute.xlu0 %1041
    %1045 = vrot.lane.b32.xlu0 %v1039, 96
    %v1046 = vpop.permute.xlu0 %1045
    %v1048 = vsel %vm324, %v1042, %v1046
    %1050 = vrot.lane.b32.xlu0 %v420, 64
    %v1051 = vpop.permute.xlu0 %1050
    %1054 = vrot.lane.b32.xlu0 %v936, 96
    %v1055 = vpop.permute.xlu0 %1054
    %v1057 = vsel %vm324, %v1051, %v1055
    %1059 = vrot.lane.b32.xlu0 %v523, 64
    %v1060 = vpop.permute.xlu0 %1059
    %1063 = vrot.lane.b32.xlu0 %v833, 96
    %v1064 = vpop.permute.xlu0 %1063
    %v1066 = vsel %vm324, %v1060, %v1064
    %1068 = vrot.lane.b32.xlu0 %v626, 64
    %v1069 = vpop.permute.xlu0 %1068
    %1072 = vrot.lane.b32.xlu0 %v730, 96
    %v1073 = vpop.permute.xlu0 %1072
    %v1075 = vsel %vm324, %v1069, %v1073
    %1077 = vrot.lane.b32.xlu0 %v729, 64
    %v1078 = vpop.permute.xlu0 %1077
    %1081 = vrot.lane.b32.xlu0 %v627, 96
    %v1082 = vpop.permute.xlu0 %1081
    %v1084 = vsel %vm324, %v1078, %v1082
    %1086 = vrot.lane.b32.xlu0 %v832, 64
    %v1087 = vpop.permute.xlu0 %1086
    %1090 = vrot.lane.b32.xlu0 %v524, 96
    %v1091 = vpop.permute.xlu0 %1090
    %v1093 = vsel %vm324, %v1087, %v1091
    %1095 = vrot.lane.b32.xlu0 %v935, 64
    %v1096 = vpop.permute.xlu0 %1095
    %1099 = vrot.lane.b32.xlu0 %v421, 96
    %v1100 = vpop.permute.xlu0 %1099
    %v1102 = vsel %vm324, %v1096, %v1100
    %1104 = vrot.lane.b32.xlu0 %v1038, 64
    %v1105 = vpop.permute.xlu0 %1104
    %1108 = vrot.lane.b32.xlu0 %v317, 96
    %v1109 = vpop.permute.xlu0 %1108
    %v1111 = vsel %vm324, %v1105, %v1109
    %1112 = vst.msk [vmem:[#allocation5] sm:$0xff] %vm225, %v1048
    %1113 = vst.msk [vmem:[#allocation5 + $0x8] sm:$0xff] %vm225, %v1057
    %1114 = vst.msk [vmem:[#allocation5 + $0x10] sm:$0xff] %vm225, %v1066
    %1115 = vst.msk [vmem:[#allocation5 + $0x18] sm:$0xff] %vm225, %v1075
    %1116 = vst.msk [vmem:[#allocation5 + $0x20] sm:$0xff] %vm225, %v1084
    %1117 = vst.msk [vmem:[#allocation5 + $0x28] sm:$0xff] %vm225, %v1093
    %1118 = vst.msk [vmem:[#allocation5 + $0x30] sm:$0xff] %vm225, %v1102
    %1119 = vst.msk [vmem:[#allocation5 + $0x38] sm:$0xff] %vm225, %v1111
    // Predicated region
    $region22: #{tpu_custom_call.1} parent=1 // pred_check
      _
    $region23: #{tpu_custom_call.1} parent=1 // pred_check_branch
      %1121 = sbr.rel (0) target = $region25
    $region24: #{tpu_custom_call.1} parent=1 // pred_region
      %s1123 = ssub.s32 1024, 1024
      %1124 = vsyncadd [#allocation4], %s1123
      %s1125 = sshll.u32 [#allocation5], 4
      %s1126 = int_to_ptr.vmem [resolvable:$true] %s1125
      %1131 = dma.vmem_to_hbm [thread:$0]  %s1126, 1024, %s4, [#allocation4], 128, 128, 8
    $region25: #{tpu_custom_call.1} parent=1 // pred_fallthru
      _
    // Predicated region
    $region26: #{tpu_custom_call.1} parent=1 // pred_check
      _
    $region27: #{tpu_custom_call.1} parent=1 // pred_check_branch
      %1133 = sbr.rel (0) target = $region29
    $region28: #{tpu_custom_call.1} parent=1 // pred_region
      %1134 = dma.done [#allocation4], 1024
    $region29: #{tpu_custom_call.1} parent=1 // pred_fallthru
      _
    %1135 = vsyncpa [#allocation3], 1
    %1136 = vsyncpa [#allocation4], 1

</llo_original>
